<compile_context>
chip_gen: v6e
topology: v6e:2x2x1
jax: 0.10.0
libtpu: 0.0.40
codegen_flags: <defaults>
</compile_context>

<pallas_src>
import jax
import jax.numpy as jnp
from jax.experimental import pallas as pl
from jax.experimental.pallas import tpu as pltpu


def _bent_identity_kernel(x_ref, o_ref):
    # Upcast so bf16/fp16 inputs don't lose precision in sqrt(x^2+1)-1;
    # cast back on the store. No-op for f32.
    x = x_ref[...].astype(jnp.float32)
    y = (jnp.sqrt(x * x + 1.0) - 1.0) * 0.5 + x
    o_ref[...] = y.astype(o_ref.dtype)


def _round_up(a, b):
    return ((a + b - 1) // b) * b


def _tpu_config():
    """Generation-aware block size / VMEM limit / TensorCore count."""
    try:
        vmem = pltpu.get_tpu_info().vmem_capacity_bytes
    except Exception:
        vmem = None
    if vmem is not None and vmem <= 64 * 1024 * 1024:
        # v7x-class: 64 MiB VMEM per TC, ~3.2 TB/s HBM, 2 TensorCores/chip.
        # 6 MiB blocks x 2 streams x 2 buffers = 24 MiB; bump the scoped
        # limit explicitly for headroom.
        return 6 * 1024 * 1024, 44 * 1024 * 1024, 2
    if vmem is not None:
        # v5e / v6e class: 128 MiB physical VMEM, single TensorCore.
        # 4 MiB blocks x 4 buffers = 16 MiB; set the limit to 32 MiB so the
        # v5e 16 MiB scoped default is never the binding constraint.
        return 4 * 1024 * 1024, 32 * 1024 * 1024, 1
    # Unknown hardware: conservative defaults that fit every generation's
    # scoped-VMEM default without touching the limit.
    return 2 * 1024 * 1024, None, 1


def _run_slab(x2d, sub, block_bytes, vmem_limit, num_cores):
    """Stream a (rows, lanes) slab through the elementwise kernel."""
    rows, lanes = x2d.shape
    itemsize = jnp.dtype(x2d.dtype).itemsize

    # Block rows: ~block_bytes of input per grid step, a multiple of the
    # sublane packing, never larger than the slab.
    tr = max(sub, (block_bytes // (lanes * itemsize)) // sub * sub)
    tr = min(tr, rows)

    # On 2-TC hardware make the block count even so both TensorCores get the
    # same number of steps (and at least 2 steps exist to shard at all).
    if num_cores >= 2 and rows >= 2 * sub:
        nb = pl.cdiv(rows, tr)
        if nb % 2 == 1:
            tr_even = max(sub, _round_up(pl.cdiv(rows, nb + 1), sub))
            if pl.cdiv(rows, tr_even) % 2 == 0:
                tr = tr_even
    num_blocks = pl.cdiv(rows, tr)

    n = rows * lanes
    cost = pl.CostEstimate(
        flops=5 * n,              # mul, add, sub, mul, add
        transcendentals=n,        # sqrt
        bytes_accessed=2 * n * itemsize,
    )
    cp_kwargs = dict(dimension_semantics=("parallel",))
    if vmem_limit is not None:
        cp_kwargs["vmem_limit_bytes"] = vmem_limit

    return pl.pallas_call(
        _bent_identity_kernel,
        out_shape=jax.ShapeDtypeStruct((rows, lanes), x2d.dtype),
        grid_spec=pltpu.PrefetchScalarGridSpec(
            num_scalar_prefetch=0,
            grid=(num_blocks,),
            in_specs=[pl.BlockSpec((tr, lanes), lambda i: (i, 0))],
            out_specs=pl.BlockSpec((tr, lanes), lambda i: (i, 0)),
        ),
        compiler_params=pltpu.CompilerParams(**cp_kwargs),
        cost_estimate=cost,
    )(x2d)


def bent_identity(x, *, target_block_bytes=None):
    """Applies BentIdentity elementwise. Accepts any shape, float dtypes only."""
    orig_shape = x.shape
    orig_dtype = x.dtype
    if not jnp.issubdtype(orig_dtype, jnp.floating):
        raise TypeError(f"bent_identity expects a floating dtype, got {orig_dtype}")
    n = x.size
    if n == 0:
        return x

    block_bytes, vmem_limit, num_cores = _tpu_config()
    if target_block_bytes is not None:
        block_bytes = target_block_bytes

    itemsize = jnp.dtype(orig_dtype).itemsize
    # Sublane packing factor: f32 -> 8 rows, bf16/f16 -> 16.
    sub = 8 * max(1, 4 // itemsize)

    # Prefer the widest lane count that lets us reshape with *no padding*.
    lanes = None
    for cand in (1024, 512, 256, 128):
        if n % (cand * sub) == 0:
            lanes = cand
            break

    if lanes is not None:
        out2d = _run_slab(x.reshape(n // lanes, lanes), sub,
                          block_bytes, vmem_limit, num_cores)
        return out2d.reshape(orig_shape)

    # Ragged size: run the kernel on the largest (sub*128)-divisible prefix
    # and handle the tiny tail (< sub*128 elements) in plain JAX — no
    # full-tensor pad + slice round trips through HBM.
    lanes = 128
    chunk = sub * lanes
    flat = x.reshape(-1)
    main_n = (n // chunk) * chunk
    pieces = []
    if main_n > 0:
        main2d = flat[:main_n].reshape(main_n // lanes, lanes)
        pieces.append(
            _run_slab(main2d, sub, block_bytes, vmem_limit, num_cores).reshape(-1))
    tail = flat[main_n:]
    if tail.size:
        t = tail.astype(jnp.float32)
        pieces.append(((jnp.sqrt(t * t + 1.0) - 1.0) * 0.5 + t).astype(orig_dtype))
    out = pieces[0] if len(pieces) == 1 else jnp.concatenate(pieces)
    return out.reshape(orig_shape)


if __name__ == "__main__":
    key = jax.random.PRNGKey(0)

    def ref_fn(v):
        return (jnp.sqrt(v.astype(jnp.float32) ** 2 + 1.0) - 1.0) / 2.0 + v.astype(jnp.float32)

    # Main check: nicely divisible shape (exercises the zero-copy slab path).
    x = jax.random.normal(key, (2, 4, 16, 16), dtype=jnp.float32)
    out = jax.block_until_ready(bent_identity(x))
    assert out.shape == x.shape and out.dtype == x.dtype
    assert jnp.allclose(out, ref_fn(x).astype(x.dtype), atol=1e-6, rtol=1e-6)

    # Ragged check: exercises the prefix-kernel + plain-JAX-tail fallback.
    k2 = jax.random.split(key)[0]
    y = jax.random.normal(k2, (257, 19), dtype=jnp.float32)
    out_y = jax.block_until_ready(bent_identity(y))
    assert out_y.shape == y.shape and out_y.dtype == y.dtype
    assert jnp.allclose(out_y, ref_fn(y).astype(y.dtype), atol=1e-6, rtol=1e-6)

    print("KERNEL_OK")
</pallas_src>

<mosaic_0001>
module attributes {stable_mosaic.version = 11 : i64} {
  func.func @_bent_identity_kernel(%arg0: i32, %arg1: memref<8x256xf32, #tpu.memory_space<vmem>>, %arg2: memref<8x256xf32, #tpu.memory_space<vmem>>) attributes {dimension_semantics = [#tpu.dimension_semantics<parallel>], iteration_bounds = array<i64: 1>, scalar_prefetch = 0 : i64, scratch_operands = 0 : i64, tpu.core_type = #tpu.core_type<tc>, window_params = [{transform_indices = @transform_0, window_bounds = array<i64: 8, 256>}, {transform_indices = @transform_1, window_bounds = array<i64: 8, 256>}]} {
    %c0 = arith.constant 0 : index
    %c0_0 = arith.constant 0 : index
    %0 = vector.load %arg1[%c0, %c0_0] : memref<8x256xf32, #tpu.memory_space<vmem>>, vector<8x256xf32>
    %1 = arith.mulf %0, %0 : vector<8x256xf32>
    %cst = arith.constant 1.000000e+00 : f32
    %2 = vector.broadcast %cst : f32 to vector<8x256xf32>
    %3 = arith.addf %1, %2 : vector<8x256xf32>
    %4 = math.sqrt %3 : vector<8x256xf32>
    %cst_1 = arith.constant 1.000000e+00 : f32
    %5 = vector.broadcast %cst_1 : f32 to vector<8x256xf32>
    %6 = arith.subf %4, %5 : vector<8x256xf32>
    %cst_2 = arith.constant 5.000000e-01 : f32
    %7 = vector.broadcast %cst_2 : f32 to vector<8x256xf32>
    %8 = arith.mulf %6, %7 : vector<8x256xf32>
    %9 = arith.addf %8, %0 : vector<8x256xf32>
    %c0_3 = arith.constant 0 : index
    %c0_4 = arith.constant 0 : index
    %10 = vector.load %arg2[%c0_3, %c0_4] : memref<8x256xf32, #tpu.memory_space<vmem>>, vector<8x256xf32>
    tpu.vector_store %arg2[%c0_3, %c0_4], %9 {strides = array<i32>} : memref<8x256xf32, #tpu.memory_space<vmem>>, vector<8x256xf32>,
    return
  }
  func.func @transform_0(%arg0: i32) -> (i32, i32) {
    %c0_i32 = arith.constant 0 : i32
    %c0_i32_0 = arith.constant 0 : i32
    return %arg0, %c0_i32 : i32, i32
  }
  func.func @transform_1(%arg0: i32) -> (i32, i32) {
    %c0_i32 = arith.constant 0 : i32
    %c0_i32_0 = arith.constant 0 : i32
    return %arg0, %c0_i32 : i32, i32
  }
}

</mosaic_0001>

<llo_original>
// kernel: tpu_custom_call.1
$region0: #{tpu_custom_call.1}
  #allocation0 [shape = 'u32[]', space=smem, size = 0x4, offset = 0x4, fixed_abs, tag = 'smem constant byte address 0x4 - core index']
  #allocation1 [shape = 'u32[144,128]{1,0:T(1,128)}', space=vmem, size = 0x12000, scoped, tag = 'internal scratch']
  %s0 = inlined_call_operand.hbm [shape: f32[8,256], index: 0, kind: input, shape index: {}]
  %s1 = inlined_call_operand.hbm [shape: f32[8,256], index: 1, kind: output, shape index: {}]
  %s2 = sld [smem:[#allocation0]]
  $region18: #{tpu_custom_call.1} parent=0
    _
  %s4 = ssub.s32 1, %s2
  %s5 = scalar_select 0, %s4, %s2
  $region1: #{tpu_custom_call.1} parent=0
    #allocation2 [shape = 'u8[8192]{0}', space=vmem, size = 0x2000, scoped, tag = 'input window, operand 0, single buffered']
    #allocation3 [shape = 's32[1]{0}', space=sflag, size = 0x4, scoped, tag = 'scoped memory for tpu_custom_call.1']
    #allocation4 [shape = 's32[1]{0}', space=sflag, size = 0x4, scoped, tag = 'scoped memory for tpu_custom_call.1']
    #allocation5 [shape = 'u8[8192]{0}', space=vmem, size = 0x2000, scoped, tag = 'output window, operand 0, single buffered']
    %6 = vsyncpa [#allocation3], 0
    %7 = vsyncpa [#allocation4], 0
    // Predicated region
    $region2: #{tpu_custom_call.1} parent=1 // pred_check
      _
    $region3: #{tpu_custom_call.1} parent=1 // pred_check_branch
      %9 = sbr.rel (0) target = $region5
    $region4: #{tpu_custom_call.1} parent=1 // pred_region
      %s11 = ssub.s32 256, 256
      %12 = vsyncadd [#allocation3], %s11
      %s14 = sshll.u32 [#allocation2], 4
      %s15 = int_to_ptr.vmem [resolvable:$true] %s14
      %17 = dma.hbm_to_vmem [thread:$0]  %s0, 256, %s15, [#allocation3]
    $region5: #{tpu_custom_call.1} parent=1 // pred_fallthru
      _
    // Predicated region
    $region6: #{tpu_custom_call.1} parent=1 // pred_check
      _
    $region7: #{tpu_custom_call.1} parent=1 // pred_check_branch
      %19 = sbr.rel (0) target = $region9
    $region8: #{tpu_custom_call.1} parent=1 // pred_region
      %20 = dma.done [#allocation3], 256
    $region9: #{tpu_custom_call.1} parent=1 // pred_fallthru
      _
    %v21 = vld [vmem:[#allocation2] sm:$0xff]
    %v22 = vld [vmem:[#allocation2 + $0x8] sm:$0xff]
    %v23 = vmul.f32 %v21, %v21
    %v24 = vmul.f32 %v22, %v22
    %v25 = vadd.f32 %v23, 1.0
    %v26 = vadd.f32 %v24, 1.0
    %v27 = vrsqrt.pop %v25
    %v28 = vmul.f32 %v25, %v27
    %vm29 = vcmp.eq.f32.partialorder %v25, inf
    %v30 = vsel %vm29, %v25, %v28
    %vm31 = vcmp.eq.f32.partialorder %v25, 0.0
    %v32 = vand.u32 %v25, 2147483648
    %v33 = vsel %vm31, %v32, %v30
    %v34 = vrsqrt.pop %v26
    %v35 = vmul.f32 %v26, %v34
    %vm36 = vcmp.eq.f32.partialorder %v26, inf
    %v37 = vsel %vm36, %v26, %v35
    %vm38 = vcmp.eq.f32.partialorder %v26, 0.0
    %v39 = vand.u32 %v26, 2147483648
    %v40 = vsel %vm38, %v39, %v37
    %v41 = vsub.f32 %v33, 1.0
    %v42 = vsub.f32 %v40, 1.0
    %v43 = vmul.f32 %v41, 0.5
    %v44 = vmul.f32 %v42, 0.5
    %v45 = vadd.f32 %v43, %v21
    %v46 = vadd.f32 %v44, %v22
    %47 = vst [vmem:[#allocation5] sm:$0xff] %v45
    %48 = vst [vmem:[#allocation5 + $0x8] sm:$0xff] %v46
    // Predicated region
    $region10: #{tpu_custom_call.1} parent=1 // pred_check
      _
    $region11: #{tpu_custom_call.1} parent=1 // pred_check_branch
      %50 = sbr.rel (0) target = $region13
    $region12: #{tpu_custom_call.1} parent=1 // pred_region
      %s52 = ssub.s32 256, 256
      %53 = vsyncadd [#allocation4], %s52
      %s55 = sshll.u32 [#allocation5], 4
      %s56 = int_to_ptr.vmem [resolvable:$true] %s55
      %58 = dma.vmem_to_hbm [thread:$0]  %s56, 256, %s1, [#allocation4]
    $region13: #{tpu_custom_call.1} parent=1 // pred_fallthru
      _
    // Predicated region
    $region14: #{tpu_custom_call.1} parent=1 // pred_check
      _
    $region15: #{tpu_custom_call.1} parent=1 // pred_check_branch
      %60 = sbr.rel (0) target = $region17
    $region16: #{tpu_custom_call.1} parent=1 // pred_region
      %61 = dma.done [#allocation4], 256
    $region17: #{tpu_custom_call.1} parent=1 // pred_fallthru
      _
    %62 = vsyncpa [#allocation3], 1
    %63 = vsyncpa [#allocation4], 1

</llo_original>
